<compile_context>
chip_gen: v6e
topology: v6e:2x2x1
jax: 0.10.0
libtpu: 0.0.40
codegen_flags: <defaults>
</compile_context>

<pallas_src>
import functools

import jax
import jax.numpy as jnp
from jax import lax
from jax.experimental import pallas as pl
from jax.experimental.pallas import tpu as pltpu


# ---------------------------------------------------------------------------
# Kernels
# ---------------------------------------------------------------------------

def _pool_kernel(x_ref, mx_ref, av_ref, *, inv_s):
    """AdaptiveMax/AvgPool3d(1): tiled max / mean reduction over S (lanes).

    Output blocks keep the same index across the S (reduction) axis, so they
    stay VMEM-resident and act as the accumulators; HBM writeback happens once
    per batch row.
    """
    s = pl.program_id(1)
    x = x_ref[...]                                     # (1, C, TS)
    tile_max = jnp.max(x, axis=2, keepdims=True)       # (1, C, 1)
    tile_sum = jnp.sum(x, axis=2, keepdims=True)       # (1, C, 1)

    @pl.when(s == 0)
    def _():
        mx_ref[...] = tile_max
        av_ref[...] = tile_sum

    @pl.when(s > 0)
    def _():
        mx_ref[...] = jnp.maximum(mx_ref[...], tile_max)
        av_ref[...] = av_ref[...] + tile_sum

    @pl.when(s == pl.num_programs(1) - 1)
    def _():
        av_ref[...] = av_ref[...] * inv_s


def _se_kernel(mx_ref, av_ref, w1t_ref, w2t_ref, ca_ref):
    """Shared SE MLP (1x1x1 convs + ReLU) on pooled (B, C) stats + sigmoid."""
    def se(v):
        h = jnp.maximum(
            jnp.dot(v, w1t_ref[...], preferred_element_type=jnp.float32), 0.0)
        return jnp.dot(h, w2t_ref[...], preferred_element_type=jnp.float32)

    ca_ref[...] = jax.nn.sigmoid(se(mx_ref[...]) + se(av_ref[...]))


def _stats_kernel(x_ref, ca_ref, mx_ref, mn_ref):
    """Per-voxel channel max / mean of out1 = x*ca (out1 never hits HBM)."""
    out1 = x_ref[...] * ca_ref[...]                      # (1, C, TS)
    mx_ref[...] = jnp.max(out1, axis=1, keepdims=True)   # (1, 1, TS)
    mn_ref[...] = jnp.mean(out1, axis=1, keepdims=True)  # (1, 1, TS)


def _spatial_conv_kernel(maxp_ref, meanp_ref, w_ref, b_ref, sa_ref,
                         *, K, Hp, Wp, L):
    """Conv3d(2->1, KxKxK, pad K//2, bias) + sigmoid on flattened padded maps.

    Each tap is a ref-level read at flat offset (kd*Hp + kh)*Wp + kw of the
    zero-padded lane-dense map; taps accumulate into a local value so the
    output is stored once.
    """
    acc = jnp.full(sa_ref.shape, b_ref[0], dtype=jnp.float32)
    # Channel order matches torch.cat([max_result, avg_result], dim=1).
    for c, src in enumerate((maxp_ref, meanp_ref)):
        for kd in range(K):
            for kh in range(K):
                for kw in range(K):
                    off = (kd * Hp + kh) * Wp + kw
                    widx = ((c * K + kd) * K + kh) * K + kw
                    acc = acc + w_ref[widx] * src[:, :, off:off + L]
    sa_ref[...] = jax.nn.sigmoid(acc)


def _apply_kernel(x_ref, ca_ref, sa_ref, o_ref):
    """final = (x * ca) * sa + x  (recomputes x*ca so out1 is never stored)."""
    o_ref[...] = x_ref[...] * ca_ref[...] * sa_ref[...] + x_ref[...]


# ---------------------------------------------------------------------------
# Wrapper
# ---------------------------------------------------------------------------

def _vmem():
    return pl.BlockSpec(memory_space=pltpu.MemorySpace.VMEM)


def _smem():
    return pl.BlockSpec(memory_space=pltpu.MemorySpace.SMEM)


def _pick_s_tile(S, C, cap=None, block_bytes=2 << 20):
    """Largest multiple of 128 dividing S with C*TS*4 <= block_bytes (or cap)."""
    if S % 128 != 0:
        return S
    if cap is None:
        cap = max(128, (block_bytes // (C * 4) // 128) * 128)
    t = min(S, max(128, (cap // 128) * 128))
    while S % t != 0:
        t -= 128
    return t


def cbam_block_3d(x_ncdhw, w1, w2, sa_w, sa_b, kernel_size, *, s_tile_cap=None):
    assert kernel_size % 2 == 1, "SpatialAttention_3D requires an odd kernel"
    B, C, D, H, W = x_ncdhw.shape
    K = kernel_size
    S = D * H * W
    x = x_ncdhw.reshape(B, C, S).astype(jnp.float32)   # free reshape; S on lanes
    TS = _pick_s_tile(S, C, s_tile_cap)
    ns = S // TS

    # ---- channel attention: tiled global max / mean over S ------------------
    mx, av = pl.pallas_call(
        functools.partial(_pool_kernel, inv_s=1.0 / S),
        grid=(B, ns),
        in_specs=[pl.BlockSpec((1, C, TS), lambda b, s: (b, 0, s))],
        out_specs=(pl.BlockSpec((1, C, 1), lambda b, s: (b, 0, 0)),
                   pl.BlockSpec((1, C, 1), lambda b, s: (b, 0, 0))),
        out_shape=(jax.ShapeDtypeStruct((B, C, 1), jnp.float32),
                   jax.ShapeDtypeStruct((B, C, 1), jnp.float32)),
        compiler_params=pltpu.CompilerParams(
            dimension_semantics=("parallel", "arbitrary")),
    )(x)

    # ---- SE MLP + sigmoid on the tiny (B, C) pooled stats --------------------
    ca = pl.pallas_call(
        _se_kernel,
        in_specs=[_vmem()] * 4,
        out_specs=_vmem(),
        out_shape=jax.ShapeDtypeStruct((B, C), jnp.float32),
    )(mx.reshape(B, C), av.reshape(B, C), w1.T, w2.T)
    ca3 = ca.reshape(B, C, 1)

    # ---- per-voxel channel max / mean of x*ca (out1 stays local to VMEM) -----
    ch_max, ch_mean = pl.pallas_call(
        _stats_kernel,
        grid=(B, ns),
        in_specs=[pl.BlockSpec((1, C, TS), lambda b, s: (b, 0, s)),
                  pl.BlockSpec((1, C, 1), lambda b, s: (b, 0, 0))],
        out_specs=(pl.BlockSpec((1, 1, TS), lambda b, s: (b, 0, s)),
                   pl.BlockSpec((1, 1, TS), lambda b, s: (b, 0, s))),
        out_shape=(jax.ShapeDtypeStruct((B, 1, S), jnp.float32),
                   jax.ShapeDtypeStruct((B, 1, S), jnp.float32)),
        compiler_params=pltpu.CompilerParams(
            dimension_semantics=("parallel", "parallel")),
    )(x, ca3)

    # ---- spatial attention: Conv3d(2->1, K, pad K//2) + sigmoid --------------
    p = K // 2
    Dp, Hp, Wp = D + 2 * p, H + 2 * p, W + 2 * p
    L = D * Hp * Wp                       # flattened (padded-H/W) output length
    extra = (K - 1) * (Wp + 1)            # tail so every shifted read is in-bounds
    Lpad = Dp * Hp * Wp + extra

    def _prep(m):  # zero-pad then flatten to one lane-dense axis (tiny glue)
        m = jnp.pad(m.reshape(B, D, H, W), ((0, 0), (p, p), (p, p), (p, p)))
        return jnp.pad(m.reshape(B, Dp * Hp * Wp),
                       ((0, 0), (0, extra))).reshape(B, 1, Lpad)

    sa_flat = pl.pallas_call(
        functools.partial(_spatial_conv_kernel, K=K, Hp=Hp, Wp=Wp, L=L),
        grid=(B,),
        in_specs=[pl.BlockSpec((1, 1, Lpad), lambda b: (b, 0, 0)),
                  pl.BlockSpec((1, 1, Lpad), lambda b: (b, 0, 0)),
                  _smem(), _smem()],
        out_specs=pl.BlockSpec((1, 1, L), lambda b: (b, 0, 0)),
        out_shape=jax.ShapeDtypeStruct((B, 1, L), jnp.float32),
        compiler_params=pltpu.CompilerParams(
            dimension_semantics=("parallel",)),
    )(_prep(ch_max), _prep(ch_mean), sa_w.reshape(-1), sa_b)
    sa = sa_flat.reshape(B, D, Hp, Wp)[:, :, :H, :W].reshape(B, 1, S)

    # ---- apply both attentions + residual: (x*ca)*sa + x ---------------------
    out = pl.pallas_call(
        _apply_kernel,
        grid=(B, ns),
        in_specs=[pl.BlockSpec((1, C, TS), lambda b, s: (b, 0, s)),
                  pl.BlockSpec((1, C, 1), lambda b, s: (b, 0, 0)),
                  pl.BlockSpec((1, 1, TS), lambda b, s: (b, 0, s))],
        out_specs=pl.BlockSpec((1, C, TS), lambda b, s: (b, 0, s)),
        out_shape=jax.ShapeDtypeStruct((B, C, S), jnp.float32),
        compiler_params=pltpu.CompilerParams(
            dimension_semantics=("parallel", "parallel")),
    )(x, ca3, sa)

    return out.reshape(B, C, D, H, W)     # free reshape back to NCDHW


# ---------------------------------------------------------------------------
# Pure-JAX reference (mirrors the PyTorch forward) for verification
# ---------------------------------------------------------------------------

def cbam_reference(x, w1, w2, sa_w, sa_b, K):
    mx = jnp.max(x, axis=(2, 3, 4))
    av = jnp.mean(x, axis=(2, 3, 4))

    def se(v):
        return jnp.maximum(v @ w1.T, 0.0) @ w2.T

    ca = jax.nn.sigmoid(se(mx) + se(av))[:, :, None, None, None]
    out = x * ca
    stats = jnp.concatenate(
        [jnp.max(out, axis=1, keepdims=True),
         jnp.mean(out, axis=1, keepdims=True)], axis=1)
    conv = lax.conv_general_dilated(
        stats, sa_w, window_strides=(1, 1, 1),
        padding=[(K // 2, K // 2)] * 3,
        dimension_numbers=("NCDHW", "OIDHW", "NCDHW"))
    sa = jax.nn.sigmoid(conv + sa_b[None, :, None, None, None])
    return out * sa + x


if __name__ == "__main__":
    # Small shapes consistent with CBAMBlock_3D(channel=C, reduction=4, kernel_size=3)
    B, C, D, H, W = 2, 16, 8, 8, 8
    reduction = 4
    K = 3
    Cr = C // reduction

    key = jax.random.PRNGKey(0)
    kx, k1, k2, k3, k4 = jax.random.split(key, 5)
    x = jax.random.normal(kx, (B, C, D, H, W), jnp.float32)
    # Shapes from the module __init__:
    w1 = jax.random.normal(k1, (Cr, C), jnp.float32) * 0.2       # Conv3d(C, C//r, 1, bias=False)
    w2 = jax.random.normal(k2, (C, Cr), jnp.float32) * 0.2       # Conv3d(C//r, C, 1, bias=False)
    sa_w = jax.random.normal(k3, (1, 2, K, K, K), jnp.float32) * 0.1  # Conv3d(2, 1, K, pad=K//2)
    sa_b = jax.random.normal(k4, (1,), jnp.float32) * 0.1

    ref = cbam_reference(x, w1, w2, sa_w, sa_b, K)

    # Run once with small S-tiles (exercises the multi-step tiled reduction and
    # the pipelined grid) and once with the default large lane-dense tile.
    for cap in (128, None):
        out = jax.block_until_ready(
            cbam_block_3d(x, w1, w2, sa_w, sa_b, K, s_tile_cap=cap))
        assert out.shape == x.shape
        err = float(jnp.max(jnp.abs(out - ref)))
        assert jnp.allclose(out, ref, atol=1e-3, rtol=1e-3), err

    print("KERNEL_OK")
</pallas_src>

<mosaic_0001>
module attributes {stable_mosaic.version = 11 : i64} {
  func.func @_pool_kernel(%arg0: i32, %arg1: i32, %arg2: memref<1x16x128xf32, #tpu.memory_space<vmem>>, %arg3: memref<1x16x1xf32, #tpu.memory_space<vmem>>, %arg4: memref<1x16x1xf32, #tpu.memory_space<vmem>>) attributes {dimension_semantics = [#tpu.dimension_semantics<parallel>, #tpu.dimension_semantics<arbitrary>], iteration_bounds = array<i64: 2, 4>, scalar_prefetch = 0 : i64, scratch_operands = 0 : i64, tpu.core_type = #tpu.core_type<tc>, window_params = [{transform_indices = @transform_0, window_bounds = array<i64: 1, 16, 128>}, {transform_indices = @transform_1, window_bounds = array<i64: 1, 16, 1>}, {transform_indices = @transform_2, window_bounds = array<i64: 1, 16, 1>}]} {
    %c0 = arith.constant 0 : index
    %c0_0 = arith.constant 0 : index
    %c0_1 = arith.constant 0 : index
    %0 = vector.load %arg2[%c0, %c0_0, %c0_1] : memref<1x16x128xf32, #tpu.memory_space<vmem>>, vector<1x16x128xf32>
    %cst = arith.constant dense<0xFF800000> : vector<1x16xf32>
    %1 = vector.multi_reduction <maximumf>, %0, %cst [2] : vector<1x16x128xf32> to vector<1x16xf32>
    %2 = vector.shape_cast %1 : vector<1x16xf32> to vector<1x16x1xf32>
    %cst_2 = arith.constant dense<0.000000e+00> : vector<1x16xf32>
    %3 = vector.multi_reduction <add>, %0, %cst_2 [2] : vector<1x16x128xf32> to vector<1x16xf32>
    %4 = vector.shape_cast %3 : vector<1x16xf32> to vector<1x16x1xf32>
    %c0_i32 = arith.constant 0 : i32
    %5 = arith.cmpi eq, %arg1, %c0_i32 : i32
    %6 = arith.extui %5 : i1 to i32
    %c0_i32_3 = arith.constant 0 : i32
    %7 = arith.cmpi ne, %6, %c0_i32_3 : i32
    scf.if %7 {
      %c0_7 = arith.constant 0 : index
      %c0_8 = arith.constant 0 : index
      %c0_9 = arith.constant 0 : index
      %14 = vector.load %arg3[%c0_7, %c0_8, %c0_9] : memref<1x16x1xf32, #tpu.memory_space<vmem>>, vector<1x16x1xf32>
      tpu.vector_store %arg3[%c0_7, %c0_8, %c0_9], %2 {strides = array<i32>} : memref<1x16x1xf32, #tpu.memory_space<vmem>>, vector<1x16x1xf32>,
      %c0_10 = arith.constant 0 : index
      %c0_11 = arith.constant 0 : index
      %c0_12 = arith.constant 0 : index
      %15 = vector.load %arg4[%c0_10, %c0_11, %c0_12] : memref<1x16x1xf32, #tpu.memory_space<vmem>>, vector<1x16x1xf32>
      tpu.vector_store %arg4[%c0_10, %c0_11, %c0_12], %4 {strides = array<i32>} : memref<1x16x1xf32, #tpu.memory_space<vmem>>, vector<1x16x1xf32>,
    } else {
    }
    %c0_i32_4 = arith.constant 0 : i32
    %8 = arith.cmpi sgt, %arg1, %c0_i32_4 : i32
    %9 = arith.extui %8 : i1 to i32
    %c0_i32_5 = arith.constant 0 : i32
    %10 = arith.cmpi ne, %9, %c0_i32_5 : i32
    scf.if %10 {
      %c0_7 = arith.constant 0 : index
      %c0_8 = arith.constant 0 : index
      %c0_9 = arith.constant 0 : index
      %14 = vector.load %arg3[%c0_7, %c0_8, %c0_9] : memref<1x16x1xf32, #tpu.memory_space<vmem>>, vector<1x16x1xf32>
      %15 = arith.maximumf %14, %2 : vector<1x16x1xf32>
      %c0_10 = arith.constant 0 : index
      %c0_11 = arith.constant 0 : index
      %c0_12 = arith.constant 0 : index
      %16 = vector.load %arg3[%c0_10, %c0_11, %c0_12] : memref<1x16x1xf32, #tpu.memory_space<vmem>>, vector<1x16x1xf32>
      tpu.vector_store %arg3[%c0_10, %c0_11, %c0_12], %15 {strides = array<i32>} : memref<1x16x1xf32, #tpu.memory_space<vmem>>, vector<1x16x1xf32>,
      %c0_13 = arith.constant 0 : index
      %c0_14 = arith.constant 0 : index
      %c0_15 = arith.constant 0 : index
      %17 = vector.load %arg4[%c0_13, %c0_14, %c0_15] : memref<1x16x1xf32, #tpu.memory_space<vmem>>, vector<1x16x1xf32>
      %18 = arith.addf %17, %4 : vector<1x16x1xf32>
      %c0_16 = arith.constant 0 : index
      %c0_17 = arith.constant 0 : index
      %c0_18 = arith.constant 0 : index
      %19 = vector.load %arg4[%c0_16, %c0_17, %c0_18] : memref<1x16x1xf32, #tpu.memory_space<vmem>>, vector<1x16x1xf32>
      tpu.vector_store %arg4[%c0_16, %c0_17, %c0_18], %18 {strides = array<i32>} : memref<1x16x1xf32, #tpu.memory_space<vmem>>, vector<1x16x1xf32>,
    } else {
    }
    %c3_i32 = arith.constant 3 : i32
    %11 = arith.cmpi eq, %arg1, %c3_i32 : i32
    %12 = arith.extui %11 : i1 to i32
    %c0_i32_6 = arith.constant 0 : i32
    %13 = arith.cmpi ne, %12, %c0_i32_6 : i32
    scf.if %13 {
      %c0_7 = arith.constant 0 : index
      %c0_8 = arith.constant 0 : index
      %c0_9 = arith.constant 0 : index
      %14 = vector.load %arg4[%c0_7, %c0_8, %c0_9] : memref<1x16x1xf32, #tpu.memory_space<vmem>>, vector<1x16x1xf32>
      %cst_10 = arith.constant 0.001953125 : f32
      %15 = vector.broadcast %cst_10 : f32 to vector<1x16x1xf32>
      %16 = arith.mulf %14, %15 : vector<1x16x1xf32>
      %c0_11 = arith.constant 0 : index
      %c0_12 = arith.constant 0 : index
      %c0_13 = arith.constant 0 : index
      %17 = vector.load %arg4[%c0_11, %c0_12, %c0_13] : memref<1x16x1xf32, #tpu.memory_space<vmem>>, vector<1x16x1xf32>
      tpu.vector_store %arg4[%c0_11, %c0_12, %c0_13], %16 {strides = array<i32>} : memref<1x16x1xf32, #tpu.memory_space<vmem>>, vector<1x16x1xf32>,
    } else {
    }
    return
  }
  func.func @transform_0(%arg0: i32, %arg1: i32) -> (i32, i32, i32) {
    %c0_i32 = arith.constant 0 : i32
    %c0_i32_0 = arith.constant 0 : i32
    return %arg0, %c0_i32, %arg1 : i32, i32, i32
  }
  func.func @transform_1(%arg0: i32, %arg1: i32) -> (i32, i32, i32) {
    %c0_i32 = arith.constant 0 : i32
    %c0_i32_0 = arith.constant 0 : i32
    %c0_i32_1 = arith.constant 0 : i32
    return %arg0, %c0_i32, %c0_i32_0 : i32, i32, i32
  }
  func.func @transform_2(%arg0: i32, %arg1: i32) -> (i32, i32, i32) {
    %c0_i32 = arith.constant 0 : i32
    %c0_i32_0 = arith.constant 0 : i32
    %c0_i32_1 = arith.constant 0 : i32
    return %arg0, %c0_i32, %c0_i32_0 : i32, i32, i32
  }
}

</mosaic_0001>

<llo_original>
// kernel: tpu_custom_call.1
$region0: #{tpu_custom_call.1}
  #allocation0 [shape = 'u32[]', space=smem, size = 0x4, offset = 0x4, fixed_abs, tag = 'smem constant byte address 0x4 - core index']
  #allocation1 [shape = 'u32[144,128]{1,0:T(1,128)}', space=vmem, size = 0x12000, scoped, tag = 'internal scratch']
  %s0 = inlined_call_operand.hbm [shape: f32[2,16,512], index: 0, kind: input, shape index: {}]
  %s1 = inlined_call_operand.vmem [shape: f32[2,16,1], index: 1, kind: output, shape index: {0}]
  %s2 = inlined_call_operand.vmem [shape: f32[2,16,1], index: 2, kind: output, shape index: {1}]
  %3 = xla_tuple %s1, %s2
  %s4 = sld [smem:[#allocation0]]
  $region61: #{tpu_custom_call.1} parent=0
    _
  %s6 = ssub.s32 1, %s4
  %s7 = scalar_select 0, %s6, %s4
  $region1: #{tpu_custom_call.1} parent=0
    #allocation2 [shape = 'u8[16384]{0}', space=vmem, size = 0x4000, scoped, tag = 'input window, operand 0']
    #allocation3 [shape = 's32[2]{0}', space=sflag, size = 0x8, scoped, tag = 'scoped memory for tpu_custom_call.1']
    %8 = vsyncpa [#allocation3], 0
    %s9 = scalar_lea.sflag [#allocation3], 1
    %10 = vsyncpa %s9, 0
    loop: start=0, step=1, limit=10
    $region2: #{tpu_custom_call.1} parent=1 // loop_pre_header
      _
    $region3: #{tpu_custom_call.1} parent=1 // loop_header
      %s12 = sphi 0, %s16
      %p13 = scmp.ge.s32.totalorder %s12, 10
      %s19 = sphi 0, %s31
      %s20 = sphi 0, %s27
      %s21 = sphi 0, %s19
      %s22 = sphi 0, %s20
      %s23 = sphi 0, %s21
      %s24 = sphi 0, %s22
      %s36 = sphi 0, %s38
      %s39 = sphi 0, %s36
      %s40 = sphi 0, %s39
      %s56 = sphi 0, %s40
      %s62 = sphi 0, %s64
      %s65 = sphi 0, %s62
      %s66 = sphi 0, %s65
      %s82 = sphi 0, %s66
      %s88 = sphi 0, %s90
      %s91 = sphi 0, %s88
      %s92 = sphi 0, %s91
      %s108 = sphi 0, %s92
    $region4: #{tpu_custom_call.1} parent=1 // loop_header_branch
      %15 = sbr.rel (%p13) target = $region8
    $region5: #{tpu_custom_call.1} parent=1 // loop_body
      %s17 = ssub.s32 %s12, 1
      %s18 = ssub.s32 %s12, 2
      %s25 = sadd.s32 1, %s20
      %p26 = scmp.ge.s32.totalorder %s25, 4
      %s27 = scalar_select %p26, 0, %s25
      %s28 = sadd.s32 1, %s19
      %s29 = scalar_select %p26, %s28, %s19
      %p30 = scmp.ge.s32.totalorder %s29, 2
      %s31 = scalar_select %p30, 0, %s29
      %s32 = ssub.s32 %s19, %s31
      %s33 = ssub.s32 %s20, %s27
      %s34 = sor.u32 %s32, %s33
      %p35 = scmp.eq.s32.totalorder %s34, 0
      %s37 = sadd.s32 %s36, 1
      %s38 = scalar_select %p35, %s36, %s37
      %p41 = pneg %p35
      %p42 = scmp.eq.s32.totalorder %s12, 7
      %p43 = por %p41, %p42
      %p44 = scmp.ne.s32.totalorder %s36, %s39
      %p45 = scmp.eq.s32.totalorder %s12, 0
      %p46 = por %p44, %p45
      %p47 = scmp.ne.s32.totalorder %s36, %s39
      %p48 = scmp.eq.s32.totalorder %s17, 7
      %p49 = por %p47, %p48
      %p50 = scmp.ne.s32.totalorder %s39, %s40
      %p51 = scmp.eq.s32.totalorder %s17, 0
      %p52 = por %p50, %p51
      %p53 = scmp.ne.s32.totalorder %s39, %s40
      %p54 = scmp.eq.s32.totalorder %s18, 7
      %p55 = por %p53, %p54
      %p57 = scmp.ne.s32.totalorder %s40, %s56
      %p58 = scmp.eq.s32.totalorder %s18, 0
      %p59 = por %p57, %p58
      %s60 = ssub.s32 %s19, %s31
      %p61 = scmp.eq.s32.totalorder %s60, 0
      %s63 = sadd.s32 %s62, 1
      %s64 = scalar_select %p61, %s62, %s63
      %p67 = pneg %p61
      %p68 = scmp.eq.s32.totalorder %s12, 7
      %p69 = por %p67, %p68
      %p70 = scmp.ne.s32.totalorder %s62, %s65
      %p71 = scmp.eq.s32.totalorder %s12, 0
      %p72 = por %p70, %p71
      %p73 = scmp.ne.s32.totalorder %s62, %s65
      %p74 = scmp.eq.s32.totalorder %s17, 7
      %p75 = por %p73, %p74
      %p76 = scmp.ne.s32.totalorder %s65, %s66
      %p77 = scmp.eq.s32.totalorder %s17, 0
      %p78 = por %p76, %p77
      %p79 = scmp.ne.s32.totalorder %s65, %s66
      %p80 = scmp.eq.s32.totalorder %s18, 7
      %p81 = por %p79, %p80
      %p83 = scmp.ne.s32.totalorder %s66, %s82
      %p84 = scmp.eq.s32.totalorder %s18, 0
      %p85 = por %p83, %p84
      %s86 = ssub.s32 %s19, %s31
      %p87 = scmp.eq.s32.totalorder %s86, 0
      %s89 = sadd.s32 %s88, 1
      %s90 = scalar_select %p87, %s88, %s89
      %p93 = pneg %p87
      %p94 = scmp.eq.s32.totalorder %s12, 7
      %p95 = por %p93, %p94
      %p96 = scmp.ne.s32.totalorder %s88, %s91
      %p97 = scmp.eq.s32.totalorder %s12, 0
      %p98 = por %p96, %p97
      %p99 = scmp.ne.s32.totalorder %s88, %s91
      %p100 = scmp.eq.s32.totalorder %s17, 7
      %p101 = por %p99, %p100
      %p102 = scmp.ne.s32.totalorder %s91, %s92
      %p103 = scmp.eq.s32.totalorder %s17, 0
      %p104 = por %p102, %p103
      %p105 = scmp.ne.s32.totalorder %s91, %s92
      %p106 = scmp.eq.s32.totalorder %s18, 7
      %p107 = por %p105, %p106
      %p109 = scmp.ne.s32.totalorder %s92, %s108
      %p110 = scmp.eq.s32.totalorder %s18, 0
      %p111 = por %p109, %p110
      %p112 = scmp.le.s32.totalorder 1, %s12
      %p113 = scmp.lt.s32.totalorder %s12, 9
      %p114 = pnand %p112, %p113
      %p115 = pneg %p114
      // Predicated region
      $region9: #{tpu_custom_call.1} parent=5 // pred_check
        _
      $region10: #{tpu_custom_call.1} parent=5 // pred_check_branch
        %117 = sbr.rel (%p114) target = $region12
      $region11: #{tpu_custom_call.1} parent=5 // pred_region
        %s118 = ssub.s32 %s12, 1
      $region12: #{tpu_custom_call.1} parent=5 // pred_fallthru
        _
      %p119 = scmp.lt.s32.totalorder %s12, 8
      // Predicated region
      $region13: #{tpu_custom_call.1} parent=5 // pred_check
        %p120 = pneg %p119
      $region14: #{tpu_custom_call.1} parent=5 // pred_check_branch
        %122 = sbr.rel (%p120) target = $region16
      $region15: #{tpu_custom_call.1} parent=5 // pred_region
        // Predicated region
        $region17: #{tpu_custom_call.1} parent=15 // pred_check
          %p123 = pneg %p46
        $region18: #{tpu_custom_call.1} parent=15 // pred_check_branch
          %125 = sbr.rel (%p123) target = $region20
        $region19: #{tpu_custom_call.1} parent=15 // pred_region
          %s126 = sand.u32 %s36, 1
          %s127 = scalar_lea.sflag [#allocation3], %s126
          %s128 = sand.u32 %s36, 1
          %s129 = smul.addr %s128, 16
          %s130 = scalar_lea.vmem [#allocation2], %s129
          %s132 = ssub.s32 256, 256
          %133 = vsyncadd %s127, %s132
          %s134 = smul.addr %s19, 8
          %s135 = sadd.s32 %s20, %s134
          %s136 = smul.addr %s135, 128
          %s137 = scalar_lea.hbm %s0, %s136
          %s138 = sshll.u32 %s130, 4
          %s139 = int_to_ptr.vmem [resolvable:$true] %s138
          %144 = dma.hbm_to_vmem [thread:$0]  %s137, 256, %s139, %s127, 512, 128, 8
        $region20: #{tpu_custom_call.1} parent=15 // pred_fallthru
          _
      $region16: #{tpu_custom_call.1} parent=5 // pred_fallthru
        _
      %p145 = scmp.le.s32.totalorder 1, %s12
      %p146 = scmp.lt.s32.totalorder %s12, 9
      %p147 = pnand %p145, %p146
      %p148 = pneg %p147
      // Predicated region
      $region21: #{tpu_custom_call.1} parent=5 // pred_check
        _
      $region22: #{tpu_custom_call.1} parent=5 // pred_check_branch
        %150 = sbr.rel (%p147) target = $region24
      $region23: #{tpu_custom_call.1} parent=5 // pred_region
        %s151 = ssub.s32 %s12, 1
        %s152 = sand.u32 %s39, 1
        %s153 = scalar_lea.sflag [#allocation3], %s152
        %s154 = sand.u32 %s39, 1
        %s155 = smul.addr %s154, 16
        %s156 = scalar_lea.vmem [#allocation2], %s155
        // Predicated region
        $region25: #{tpu_custom_call.1} parent=23 // pred_check
          %p157 = pneg %p52
        $region26: #{tpu_custom_call.1} parent=23 // pred_check_branch
          %159 = sbr.rel (%p157) target = $region28
        $region27: #{tpu_custom_call.1} parent=23 // pred_region
          %160 = dma.done %s153, 256
        $region28: #{tpu_custom_call.1} parent=23 // pred_fallthru
          _
        %s161 = sand.u32 %s39, 1
        %s162 = scalar_lea.sflag [#allocation3], %s161
        %s163 = sand.u32 %s39, 1
        %s164 = smul.addr %s163, 16
        %s165 = scalar_lea.vmem [#allocation2], %s164
        %p166 = pneg %p52
        %p167 = pneg %p49
        %p168 = pneg %p78
        %p169 = pneg %p75
        %p170 = scmp.lt.s32.totalorder %s21, 1
        %s171 = scalar_select %p170, %s21, 1
        %s172 = smul.addr %s171, 2
        %s173 = smul.addr %s172, 8
        %s174 = scalar_lea.vmem %s1, %s173
        %p175 = pneg %p104
        %p176 = pneg %p101
        %p177 = scmp.lt.s32.totalorder %s21, 1
        %s178 = scalar_select %p177, %s21, 1
        %s179 = smul.addr %s178, 2
        %s180 = smul.addr %s179, 8
        %s181 = scalar_lea.vmem %s2, %s180
        %p182 = scmp.lt.s32.totalorder %s21, 1
        %s183 = scalar_select %p182, %s21, 1
        %s184 = smul.addr %s183, 2
        %s185 = smul.addr %s184, 8
        %s186 = scalar_lea.vmem %s1, %s185
        %p187 = scmp.lt.s32.totalorder %s21, 1
        %s188 = scalar_select %p187, %s21, 1
        %s189 = smul.addr %s188, 2
        %s190 = smul.addr %s189, 8
        %s191 = scalar_lea.vmem %s2, %s190
        %v192 = vld [vmem:[%s156] sm:$0xff]
        %v193 = vld [vmem:[%s156 + $0x8] sm:$0xff]
        %194 = vmax.xlane.f32.xlu0 %v192
        %v195 = vpop.xlane.xlu0 %194
        %196 = vmax.xlane.f32.xlu0 %v193
        %v197 = vpop.xlane.xlu0 %196
        %198 = vadd.xlane.f32.xlu0 %v192
        %v199 = vpop.xlane.xlu0 %198
        %200 = vadd.xlane.f32.xlu0 %v193
        %v201 = vpop.xlane.xlu0 %200
        %p202 = scmp.eq.s32.totalorder %s22, 0
        // Predicated region
        $region29: #{tpu_custom_call.1} parent=23 // pred_check
          %p203 = pneg %p202
        $region30: #{tpu_custom_call.1} parent=23 // pred_check_branch
          %205 = sbr.rel (%p203) target = $region32
        $region31: #{tpu_custom_call.1} parent=23 // pred_region
          %vm206 = vcmask 7168
          %207 = vst.msk [vmem:[%s186] sm:$0xff] %vm206, %v195
          %208 = vst.msk [vmem:[%s186 + $0x8] sm:$0xff] %vm206, %v197
          %209 = vst.msk [vmem:[%s191] sm:$0xff] %vm206, %v199
          %210 = vst.msk [vmem:[%s191 + $0x8] sm:$0xff] %vm206, %v201
        $region32: #{tpu_custom_call.1} parent=23 // pred_fallthru
          _
        %p211 = scmp.gt.s32.totalorder %s22, 0
        // Predicated region
        $region33: #{tpu_custom_call.1} parent=23 // pred_check
          %p212 = pneg %p211
        $region34: #{tpu_custom_call.1} parent=23 // pred_check_branch
          %214 = sbr.rel (%p212) target = $region36
        $region35: #{tpu_custom_call.1} parent=23 // pred_region
          %v215 = vld [vmem:[%s186] sm:$0xff]
          %v216 = vld [vmem:[%s186 + $0x8] sm:$0xff]
          %v217 = vmax.f32 %v215, %v195
          %v218 = vmax.f32 %v216, %v197
          %vm219 = vcmask 7168
          %220 = vst.msk [vmem:[%s186] sm:$0xff] %vm219, %v217
          %221 = vst.msk [vmem:[%s186 + $0x8] sm:$0xff] %vm219, %v218
          %v222 = vld [vmem:[%s191] sm:$0xff]
          %v223 = vld [vmem:[%s191 + $0x8] sm:$0xff]
          %v224 = vadd.f32 %v222, %v199
          %v225 = vadd.f32 %v223, %v201
          %226 = vst.msk [vmem:[%s191] sm:$0xff] %vm219, %v224
          %227 = vst.msk [vmem:[%s191 + $0x8] sm:$0xff] %vm219, %v225
        $region36: #{tpu_custom_call.1} parent=23 // pred_fallthru
          _
        %p228 = scmp.eq.s32.totalorder %s22, 3
        // Predicated region
        $region37: #{tpu_custom_call.1} parent=23 // pred_check
          %p229 = pneg %p228
        $region38: #{tpu_custom_call.1} parent=23 // pred_check_branch
          %231 = sbr.rel (%p229) target = $region40
        $region39: #{tpu_custom_call.1} parent=23 // pred_region
          %v232 = vld [vmem:[%s191] sm:$0xff]
          %v233 = vld [vmem:[%s191 + $0x8] sm:$0xff]
          %v234 = vmul.f32 %v232, 0.001953125
          %v235 = vmul.f32 %v233, 0.001953125
          %vm236 = vcmask 7168
          %237 = vst.msk [vmem:[%s191] sm:$0xff] %vm236, %v234
          %238 = vst.msk [vmem:[%s191 + $0x8] sm:$0xff] %vm236, %v235
        $region40: #{tpu_custom_call.1} parent=23 // pred_fallthru
          _
        %p239 = scmp.lt.s32.totalorder %s21, 1
        %s240 = scalar_select %p239, %s21, 1
        %s241 = smul.addr %s240, 2
        %s242 = smul.addr %s241, 8
        %s243 = scalar_lea.vmem %s1, %s242
        %p244 = scmp.lt.s32.totalorder %s21, 1
        %s245 = scalar_select %p244, %s21, 1
        %s246 = smul.addr %s245, 2
        %s247 = smul.addr %s246, 8
        %s248 = scalar_lea.vmem %s2, %s247
        // Predicated region
        $region41: #{tpu_custom_call.1} parent=23 // pred_check
          %p249 = pneg %p75
        $region42: #{tpu_custom_call.1} parent=23 // pred_check_branch
          %251 = sbr.rel (%p249) target = $region44
        $region43: #{tpu_custom_call.1} parent=23 // pred_region
          _
        $region44: #{tpu_custom_call.1} parent=23 // pred_fallthru
          _
        // Predicated region
        $region45: #{tpu_custom_call.1} parent=23 // pred_check
          %p252 = pneg %p101
        $region46: #{tpu_custom_call.1} parent=23 // pred_check_branch
          %254 = sbr.rel (%p252) target = $region48
        $region47: #{tpu_custom_call.1} parent=23 // pred_region
          _
        $region48: #{tpu_custom_call.1} parent=23 // pred_fallthru
          _
      $region24: #{tpu_custom_call.1} parent=5 // pred_fallthru
        _
      %p255 = scmp.le.s32.totalorder 2, %s12
      // Predicated region
      $region49: #{tpu_custom_call.1} parent=5 // pred_check
        %p256 = pneg %p255
      $region50: #{tpu_custom_call.1} parent=5 // pred_check_branch
        %258 = sbr.rel (%p256) target = $region52
      $region51: #{tpu_custom_call.1} parent=5 // pred_region
        %s259 = ssub.s32 %s12, 2
        // Predicated region
        $region53: #{tpu_custom_call.1} parent=51 // pred_check
          %p260 = pneg %p81
        $region54: #{tpu_custom_call.1} parent=51 // pred_check_branch
          %262 = sbr.rel (%p260) target = $region56
        $region55: #{tpu_custom_call.1} parent=51 // pred_region
          %p263 = scmp.lt.s32.totalorder %s23, 1
          %s264 = scalar_select %p263, %s23, 1
          %s265 = smul.addr %s264, 2
          %s266 = smul.addr %s265, 8
          %s267 = scalar_lea.vmem %s1, %s266
        $region56: #{tpu_custom_call.1} parent=51 // pred_fallthru
          _
        // Predicated region
        $region57: #{tpu_custom_call.1} parent=51 // pred_check
          %p268 = pneg %p107
        $region58: #{tpu_custom_call.1} parent=51 // pred_check_branch
          %270 = sbr.rel (%p268) target = $region60
        $region59: #{tpu_custom_call.1} parent=51 // pred_region
          %p271 = scmp.lt.s32.totalorder %s23, 1
          %s272 = scalar_select %p271, %s23, 1
          %s273 = smul.addr %s272, 2
          %s274 = smul.addr %s273, 8
          %s275 = scalar_lea.vmem %s2, %s274
        $region60: #{tpu_custom_call.1} parent=51 // pred_fallthru
          _
      $region52: #{tpu_custom_call.1} parent=5 // pred_fallthru
        _
    $region6: #{tpu_custom_call.1} parent=1 // loop_footer
      %s16 = sadd.s32 1, %s12
    $region7: #{tpu_custom_call.1} parent=1 // loop_footer_branch
      %11 = sbr.rel target = $region3
    $region8: #{tpu_custom_call.1} parent=1 // loop_exit
      _
    %276 = vsyncpa [#allocation3], 1
    %s277 = scalar_lea.sflag [#allocation3], 1
    %278 = vsyncpa %s277, 1

</llo_original>
